<compile_context>
chip_gen: v7x
topology: tpu7x:2x2x1
jax: 0.10.0
libtpu: 0.0.40
codegen_flags: <defaults>
</compile_context>

<pallas_src>
import functools
import numpy as np

import jax
import jax.numpy as jnp
from jax.experimental import pallas as pl
from jax.experimental.pallas import tpu as pltpu

EPS = 1e-8

_VMEM = functools.partial(pl.BlockSpec, memory_space=pltpu.MemorySpace.VMEM)


# ----------------------------- Pallas kernels ------------------------------

def _fused_pre_kernel(mero_ref, base_ref, bgm_ref, labels_ref, tlen_ref,
                      scalars_ref, lse_ref, probs_ref):
    """Coherence loss + base CE + cardinality + softmax/lse(mero), one pass.

    Inputs may be bf16 or f32; all math is done in f32 (v5e VPU/EUP have no
    bf16 anyway), outputs: packed scalars (f32), lse (f32), probs (bf16).
    """
    ml = mero_ref[...].astype(jnp.float32)     # [B, Q, M1]
    bl = base_ref[...].astype(jnp.float32)     # [B, C]
    gl = bgm_ref[...].astype(jnp.float32)      # [B, M1, C]
    B, Q, M1 = ml.shape
    C = bl.shape[-1]

    # ---- softmax(mero) + its log-sum-exp (lse reused by the post-match CE) ----
    mm = jnp.max(ml, axis=-1, keepdims=True)
    em = jnp.exp(ml - mm)
    denm = jnp.sum(em, axis=-1, keepdims=True)
    p_mero = em / denm                                         # [B, Q, M1] f32
    lse_ref[...] = (jnp.log(denm) + mm)[..., 0]                # [B, Q] f32
    # bf16 store: halves the VMEM->HBM writeback and the D2H transfer the host
    # matcher waits on (compute stayed f32; only near-exact ties can flip).
    probs_ref[...] = p_mero.astype(probs_ref.dtype)
    # TODO(synk): at production shapes emit the probs as a lane-dense
    # [B, Q*M1]-padded slab (wrapper-side layout plumbing) to avoid masked
    # vst.msk partial stores when M1 is not a multiple of 128.

    # ---- base softmax / log-sum-exp computed once, reused by CE + coherence ----
    mb = jnp.max(bl, axis=-1, keepdims=True)
    eb = jnp.exp(bl - mb)
    denb = jnp.sum(eb, axis=-1, keepdims=True)
    p_base = eb / denb                                         # [B, C]
    lse_b = jnp.log(denb) + mb                                 # [B, 1]

    # ---- coherence loss ----
    mg = jnp.max(gl, axis=-1, keepdims=True)
    eg = jnp.exp(gl - mg)
    p_bgm = eg / jnp.sum(eg, axis=-1, keepdims=True)           # [B, M1, C]
    s = jnp.sum(p_mero, axis=1)                                # [B, M1]
    # torch.bmm(P_mero, P_bgm).sum(1) == einsum('bm,bmc->bc') with q pre-reduced.
    # TODO(synk): move this contraction onto the MXU only if C >= ~256 and
    # M1 >= ~128 (v6e/v7x 256-wide tiles); at DETR-ish sizes the VPU+XLU path wins.
    pmb = jnp.sum(s[:, :, None] * p_bgm, axis=1)               # [B, C]
    pmb = pmb / (jnp.sum(pmb, axis=-1, keepdims=True) + EPS)   # matches reference
    pb = p_base + EPS
    pmb = pmb + EPS
    # kl1 + kl2 == sum((pmb - pb) * (log pmb - log pb)) / B  -> one log pair.
    coh = jnp.sum((pmb - pb) * (jnp.log(pmb) - jnp.log(pb))) / B

    # ---- base cross-entropy ----
    labels = labels_ref[...]                                   # [B, 1] int32
    iota_c = jax.lax.broadcasted_iota(jnp.int32, (B, C), 1)
    onehot_b = (iota_c == labels).astype(jnp.float32)
    picked_b = jnp.sum(bl * onehot_b, axis=-1, keepdims=True)  # [B, 1]
    bce = jnp.mean(lse_b - picked_b)

    # ---- cardinality error (logging term, summed into the hungarian loss) ----
    # argmax(-1) != M1-1  <=>  max over non-"no-object" classes >= last class
    # (torch.argmax returns the first occurrence on ties, so >= is exact).
    last_val = ml[..., M1 - 1]                                 # static lane slice [B, Q]
    iota_m = jax.lax.broadcasted_iota(jnp.int32, (B, Q, M1), 2)
    other_max = jnp.max(jnp.where(iota_m == (M1 - 1), -jnp.inf, ml), axis=-1)
    card_pred = jnp.sum((other_max >= last_val).astype(jnp.float32),
                        axis=-1, keepdims=True)                # [B, 1]
    card = jnp.mean(jnp.abs(card_pred - tlen_ref[...]))

    # ---- pack the three scalar losses into ONE lane-dense output tile ----
    lane = jax.lax.broadcasted_iota(jnp.int32, (1, 128), 1)
    scalars_ref[...] = (jnp.where(lane == 0, coh, 0.0)
                        + jnp.where(lane == 1, bce, 0.0)
                        + jnp.where(lane == 2, card, 0.0))


def _mero_weighted_ce_kernel(eos_coef, logits_ref, lse_ref, tgt_ref, out_ref):
    """Class-weighted CE over mero logits; lse precomputed, eos weight = one compare."""
    logits = logits_ref[...].astype(jnp.float32)   # [B, Q, M1]
    lse = lse_ref[...]                             # [B, Q] f32 (from pre-match kernel)
    tgt = tgt_ref[...]                             # [B, Q] int32
    B, Q, M1 = logits.shape
    iota = jax.lax.broadcasted_iota(jnp.int32, (B, Q, M1), 2)
    onehot = (iota == tgt[:, :, None]).astype(jnp.float32)
    picked = jnp.sum(logits * onehot, axis=-1)     # [B, Q]
    nll = lse - picked                             # [B, Q]
    wt = jnp.where(tgt == (M1 - 1), jnp.float32(eos_coef), jnp.float32(1.0))
    # F.cross_entropy with class weights: sum(w_i * nll_i) / sum(w_i)
    out_ref[...] = jnp.reshape(jnp.sum(wt * nll) / jnp.sum(wt), (1, 1))


# ------------------------------ wrappers ------------------------------------

@jax.jit
def _pre_losses(mero_logits, base_logits, bgm_logits, base_labels_2d, tgt_len_2d):
    B, Q, M1 = mero_logits.shape
    # TODO(synk): at production (DETR-scale) shapes add a grid over B with
    # tiled BlockSpecs + f32 VMEM accumulators: dimension_semantics=("parallel",)
    # to shard across v7x's two TensorCores, tiles sized against 32 MiB scoped
    # VMEM (x2 double-buffering per input), and an explicit vmem_limit_bytes on
    # v5e (16 MiB scoped default). Whole-array VMEM specs are ample at toy sizes.
    return pl.pallas_call(
        _fused_pre_kernel,
        out_shape=(
            jax.ShapeDtypeStruct((1, 128), jnp.float32),     # [coh, bce, card, 0...]
            jax.ShapeDtypeStruct((B, Q), jnp.float32),       # lse(mero)
            jax.ShapeDtypeStruct((B, Q, M1), jnp.bfloat16),  # softmax(mero) for matcher
        ),
        in_specs=[_VMEM() for _ in range(5)],
        out_specs=(_VMEM(), _VMEM(), _VMEM()),
    )(mero_logits, base_logits, bgm_logits, base_labels_2d, tgt_len_2d)


@functools.lru_cache(maxsize=None)
def _get_finalize(eos_coef):
    kernel = functools.partial(_mero_weighted_ce_kernel, float(eos_coef))

    @jax.jit
    def finalize(mero_logits, lse_mero, target_classes, scalars,
                 lambda_mero, lambda_base, lambda_coh):
        loss_ce = pl.pallas_call(
            kernel,
            out_shape=jax.ShapeDtypeStruct((1, 1), jnp.float32),
            in_specs=[_VMEM(), _VMEM(), _VMEM()],
            out_specs=_VMEM(),
        )(mero_logits, lse_mero, target_classes)[0, 0]
        coh, bce, card_err = scalars[0, 0], scalars[0, 1], scalars[0, 2]
        L_mero = (loss_ce + card_err) * lambda_mero
        L_base = bce * lambda_base
        L_coh = coh * lambda_coh
        return {'total_loss': L_mero + L_base + L_coh,
                'mero_loss': L_mero, 'base_loss': L_base, 'coh_loss': L_coh}

    return finalize


# ------------------------- host-side glue (no-grad) -------------------------

def _linear_sum_assignment(cost):
    """Exact minimum-cost linear sum assignment (Jonker-Volgenant potentials).

    Drop-in for scipy.optimize.linear_sum_assignment on rectangular matrices.
    O(min(R,C)^2 * max(R,C)) — robust at production query counts, unlike the
    factorial brute force it replaces.
    """
    # TODO(synk): Hungarian matching is a sequential augmenting-path algorithm
    # with no clean Pallas equivalent; it runs on host between the two launches.
    cost = np.asarray(cost, dtype=np.float64)
    transposed = False
    if cost.shape[0] > cost.shape[1]:
        cost = cost.T
        transposed = True
    n, m = cost.shape  # n <= m
    u = np.zeros(n + 1)
    v = np.zeros(m + 1)
    p = np.zeros(m + 1, dtype=np.int64)     # p[j] = row (1-based) assigned to col j
    way = np.zeros(m + 1, dtype=np.int64)
    for i in range(1, n + 1):
        p[0] = i
        j0 = 0
        minv = np.full(m + 1, np.inf)
        used = np.zeros(m + 1, dtype=bool)
        while True:
            used[j0] = True
            i0 = p[j0]
            delta = np.inf
            j1 = 0
            for j in range(1, m + 1):
                if not used[j]:
                    cur = cost[i0 - 1, j - 1] - u[i0] - v[j]
                    if cur < minv[j]:
                        minv[j] = cur
                        way[j] = j0
                    if minv[j] < delta:
                        delta = minv[j]
                        j1 = j
            for j in range(m + 1):
                if used[j]:
                    u[p[j]] += delta
                    v[j] -= delta
                else:
                    minv[j] -= delta
            j0 = j1
            if p[j0] == 0:
                break
        while j0 != 0:
            j1 = way[j0]
            p[j0] = p[j1]
            j0 = j1
    rows = p[1:] - 1
    cols = np.arange(m, dtype=np.int64)
    mask = rows >= 0
    row_ind, col_ind = rows[mask], cols[mask]
    if transposed:
        row_ind, col_ind = col_ind, row_ind
    order = np.argsort(row_ind)
    return row_ind[order].astype(np.int64), col_ind[order].astype(np.int64)


def tot_loss_forward(outputs, targets, num_mero_classes,
                     lambda_mero=1.0, lambda_base=1.0, lambda_coh=1.0,
                     eos_coef=0.1):
    mero_logits = outputs['mero']['mero_logits']     # [B, Q, M+1]
    base_logits = outputs['base']                    # [B, C]
    bgm_logits = outputs['base_given_mero']          # [B, M+1, C]
    B, Q, M1 = mero_logits.shape
    M = num_mero_classes
    assert M1 == M + 1

    mero_targets = [np.asarray(t)[np.asarray(t) != M] for t in targets['mero']]
    tgt_len = np.array([len(t) for t in mero_targets], np.float32).reshape(B, 1)
    base_labels_2d = jnp.asarray(targets['base'], jnp.int32).reshape(B, 1)

    # Launch the fused pre-match kernel first: the TPU computes the coherence
    # loss, base CE, cardinality error, lse(mero) and softmax(mero) while the
    # host sets up the matcher.  Only the small bf16 probability tensor and the
    # packed scalars come back (no full-logits device_get or host softmax).
    scalars, lse_mero, mero_probs = _pre_losses(
        mero_logits, base_logits, bgm_logits, base_labels_2d,
        jnp.asarray(tgt_len))

    # -- Hungarian matching (torch.no_grad() in the reference) on host --
    # TODO(synk): at production shapes, gather the [B, Q, T_max] cost columns
    # on device so only that slab is device_get'd.
    probs_np = np.asarray(jax.device_get(mero_probs), dtype=np.float32)
    target_classes = np.full((B, Q), M, dtype=np.int32)
    for b in range(B):
        tgt = mero_targets[b].astype(np.int64)
        if len(tgt) == 0:
            continue
        cost = -probs_np[b][:, tgt]                  # [Q, T]
        rows, cols = _linear_sum_assignment(cost)
        target_classes[b, rows] = tgt[cols].astype(np.int32)

    finalize = _get_finalize(float(eos_coef))
    return finalize(mero_logits, lse_mero,
                    jnp.asarray(target_classes, jnp.int32), scalars,
                    jnp.float32(lambda_mero), jnp.float32(lambda_base),
                    jnp.float32(lambda_coh))


# --------------------------------- main --------------------------------------

if __name__ == "__main__":
    key = jax.random.PRNGKey(0)
    # B=batch, Q=num_queries, M=num mero classes (w/o no-object), C=num base classes
    B, Q, M, C = 2, 8, 5, 4
    k1, k2, k3, k4 = jax.random.split(key, 4)

    mero_logits = jax.random.normal(k1, (B, Q, M + 1), jnp.float32)
    base_logits = jax.random.normal(k2, (B, C), jnp.float32)
    bgm_logits = jax.random.normal(k3, (B, M + 1, C), jnp.float32)
    base_labels = jax.random.randint(k4, (B,), 0, C)

    outputs = {
        'mero': {'mero_logits': mero_logits},
        'base': base_logits,
        'base_given_mero': bgm_logits,
    }
    # mero targets: value M (== num_mero_classes) is the "no-object" label and
    # gets filtered out in ToTLoss.forward, matching the reference semantics.
    targets = {
        'mero': [np.array([0, 2, M], np.int32), np.array([1, 3, 4], np.int32)],
        'base': np.asarray(base_labels),
    }

    losses = tot_loss_forward(outputs, targets, num_mero_classes=M,
                              lambda_mero=1.0, lambda_base=1.0,
                              lambda_coh=1.0, eos_coef=0.1)
    jax.block_until_ready(losses['total_loss'])
    print("KERNEL_OK")
</pallas_src>

<mosaic_0001>
module attributes {stable_mosaic.version = 11 : i64} {
  func.func @_fused_pre_kernel(%arg0: memref<2x8x6xf32, #tpu.memory_space<vmem>>, %arg1: memref<2x4xf32, #tpu.memory_space<vmem>>, %arg2: memref<2x6x4xf32, #tpu.memory_space<vmem>>, %arg3: memref<2x1xi32, #tpu.memory_space<vmem>>, %arg4: memref<2x1xf32, #tpu.memory_space<vmem>>, %arg5: memref<1x128xf32, #tpu.memory_space<vmem>>, %arg6: memref<2x8xf32, #tpu.memory_space<vmem>>, %arg7: memref<2x8x6xbf16, #tpu.memory_space<vmem>>) attributes {dimension_semantics = [], scalar_prefetch = 0 : i64, scratch_operands = 0 : i64, tpu.core_type = #tpu.core_type<tc>} {
    %c0 = arith.constant 0 : index
    %c0_0 = arith.constant 0 : index
    %c0_1 = arith.constant 0 : index
    %0 = vector.load %arg0[%c0, %c0_0, %c0_1] : memref<2x8x6xf32, #tpu.memory_space<vmem>>, vector<2x8x6xf32>
    %c0_2 = arith.constant 0 : index
    %c0_3 = arith.constant 0 : index
    %1 = vector.load %arg1[%c0_2, %c0_3] : memref<2x4xf32, #tpu.memory_space<vmem>>, vector<2x4xf32>
    %c0_4 = arith.constant 0 : index
    %c0_5 = arith.constant 0 : index
    %c0_6 = arith.constant 0 : index
    %2 = vector.load %arg2[%c0_4, %c0_5, %c0_6] : memref<2x6x4xf32, #tpu.memory_space<vmem>>, vector<2x6x4xf32>
    %cst = arith.constant dense<0xFF800000> : vector<2x8xf32>
    %3 = vector.multi_reduction <maximumf>, %0, %cst [2] : vector<2x8x6xf32> to vector<2x8xf32>
    %4 = vector.shape_cast %3 : vector<2x8xf32> to vector<2x8x1xf32>
    %5 = vector.broadcast %4 : vector<2x8x1xf32> to vector<2x8x6xf32>
    %6 = arith.subf %0, %5 : vector<2x8x6xf32>
    %7 = math.exp %6 : vector<2x8x6xf32>
    %cst_7 = arith.constant dense<0.000000e+00> : vector<2x8xf32>
    %8 = vector.multi_reduction <add>, %7, %cst_7 [2] : vector<2x8x6xf32> to vector<2x8xf32>
    %9 = vector.shape_cast %8 : vector<2x8xf32> to vector<2x8x1xf32>
    %10 = vector.broadcast %9 : vector<2x8x1xf32> to vector<2x8x6xf32>
    %11 = arith.divf %7, %10 : vector<2x8x6xf32>
    %12 = math.log %9 : vector<2x8x1xf32>
    %13 = arith.addf %12, %4 : vector<2x8x1xf32>
    %14 = vector.shape_cast %13 : vector<2x8x1xf32> to vector<2x8xf32>
    %c0_8 = arith.constant 0 : index
    %c0_9 = arith.constant 0 : index
    %15 = vector.load %arg6[%c0_8, %c0_9] : memref<2x8xf32, #tpu.memory_space<vmem>>, vector<2x8xf32>
    tpu.vector_store %arg6[%c0_8, %c0_9], %14 {strides = array<i32>} : memref<2x8xf32, #tpu.memory_space<vmem>>, vector<2x8xf32>,
    %16 = arith.truncf %11 : vector<2x8x6xf32> to vector<2x8x6xbf16>
    %c0_10 = arith.constant 0 : index
    %c0_11 = arith.constant 0 : index
    %c0_12 = arith.constant 0 : index
    %17 = vector.load %arg7[%c0_10, %c0_11, %c0_12] : memref<2x8x6xbf16, #tpu.memory_space<vmem>>, vector<2x8x6xbf16>
    tpu.vector_store %arg7[%c0_10, %c0_11, %c0_12], %16 {strides = array<i32>} : memref<2x8x6xbf16, #tpu.memory_space<vmem>>, vector<2x8x6xbf16>,
    %cst_13 = arith.constant dense<0xFF800000> : vector<2xf32>
    %18 = vector.multi_reduction <maximumf>, %1, %cst_13 [1] : vector<2x4xf32> to vector<2xf32>
    %19 = vector.shape_cast %18 : vector<2xf32> to vector<2x1xf32>
    %20 = vector.broadcast %19 : vector<2x1xf32> to vector<2x4xf32>
    %21 = arith.subf %1, %20 : vector<2x4xf32>
    %22 = math.exp %21 : vector<2x4xf32>
    %cst_14 = arith.constant dense<0.000000e+00> : vector<2xf32>
    %23 = vector.multi_reduction <add>, %22, %cst_14 [1] : vector<2x4xf32> to vector<2xf32>
    %24 = vector.shape_cast %23 : vector<2xf32> to vector<2x1xf32>
    %25 = vector.broadcast %24 : vector<2x1xf32> to vector<2x4xf32>
    %26 = arith.divf %22, %25 : vector<2x4xf32>
    %27 = math.log %24 : vector<2x1xf32>
    %28 = arith.addf %27, %19 : vector<2x1xf32>
    %cst_15 = arith.constant dense<0xFF800000> : vector<2x6xf32>
    %29 = vector.multi_reduction <maximumf>, %2, %cst_15 [2] : vector<2x6x4xf32> to vector<2x6xf32>
    %30 = vector.shape_cast %29 : vector<2x6xf32> to vector<2x6x1xf32>
    %31 = vector.broadcast %30 : vector<2x6x1xf32> to vector<2x6x4xf32>
    %32 = arith.subf %2, %31 : vector<2x6x4xf32>
    %33 = math.exp %32 : vector<2x6x4xf32>
    %cst_16 = arith.constant dense<0.000000e+00> : vector<2x6xf32>
    %34 = vector.multi_reduction <add>, %33, %cst_16 [2] : vector<2x6x4xf32> to vector<2x6xf32>
    %35 = vector.shape_cast %34 : vector<2x6xf32> to vector<2x6x1xf32>
    %36 = vector.broadcast %35 : vector<2x6x1xf32> to vector<2x6x4xf32>
    %37 = arith.divf %33, %36 : vector<2x6x4xf32>
    %cst_17 = arith.constant dense<0.000000e+00> : vector<2x6xf32>
    %38 = vector.multi_reduction <add>, %11, %cst_17 [1] : vector<2x8x6xf32> to vector<2x6xf32>
    %39 = vector.shape_cast %38 : vector<2x6xf32> to vector<2x6x1xf32>
    %40 = vector.broadcast %39 : vector<2x6x1xf32> to vector<2x6x4xf32>
    %41 = arith.mulf %40, %37 : vector<2x6x4xf32>
    %cst_18 = arith.constant dense<0.000000e+00> : vector<2x4xf32>
    %42 = vector.multi_reduction <add>, %41, %cst_18 [1] : vector<2x6x4xf32> to vector<2x4xf32>
    %cst_19 = arith.constant dense<0.000000e+00> : vector<2xf32>
    %43 = vector.multi_reduction <add>, %42, %cst_19 [1] : vector<2x4xf32> to vector<2xf32>
    %44 = vector.shape_cast %43 : vector<2xf32> to vector<2x1xf32>
    %cst_20 = arith.constant 9.99999993E-9 : f32
    %45 = vector.broadcast %cst_20 : f32 to vector<2x1xf32>
    %46 = arith.addf %44, %45 : vector<2x1xf32>
    %47 = vector.broadcast %46 : vector<2x1xf32> to vector<2x4xf32>
    %48 = arith.divf %42, %47 : vector<2x4xf32>
    %cst_21 = arith.constant 9.99999993E-9 : f32
    %49 = vector.broadcast %cst_21 : f32 to vector<2x4xf32>
    %50 = arith.addf %26, %49 : vector<2x4xf32>
    %cst_22 = arith.constant 9.99999993E-9 : f32
    %51 = vector.broadcast %cst_22 : f32 to vector<2x4xf32>
    %52 = arith.addf %48, %51 : vector<2x4xf32>
    %53 = arith.subf %52, %50 : vector<2x4xf32>
    %54 = math.log %52 : vector<2x4xf32>
    %55 = math.log %50 : vector<2x4xf32>
    %56 = arith.subf %54, %55 : vector<2x4xf32>
    %57 = arith.mulf %53, %56 : vector<2x4xf32>
    %58 = vector.shape_cast %57 : vector<2x4xf32> to vector<1x2x4xf32>
    %cst_23 = arith.constant dense<0.000000e+00> : vector<1xf32>
    %59 = vector.multi_reduction <add>, %58, %cst_23 [1, 2] : vector<1x2x4xf32> to vector<1xf32>
    %60 = vector.shape_cast %59 : vector<1xf32> to vector<1x1x1xf32>
    %61 = vector.extract %60[0, 0, 0] : f32 from vector<1x1x1xf32>
    %cst_24 = arith.constant 2.000000e+00 : f32
    %62 = arith.divf %61, %cst_24 : f32
    %c0_25 = arith.constant 0 : index
    %c0_26 = arith.constant 0 : index
    %63 = vector.load %arg3[%c0_25, %c0_26] : memref<2x1xi32, #tpu.memory_space<vmem>>, vector<2x1xi32>
    %64 = tpu.iota {dimensions = array<i32: 1>} : vector<2x4xi32>
    %65 = vector.broadcast %63 : vector<2x1xi32> to vector<2x4xi32>
    %66 = arith.cmpi eq, %64, %65 : vector<2x4xi32>
    %67 = arith.extui %66 : vector<2x4xi1> to vector<2x4xi32>
    %68 = arith.sitofp %67 : vector<2x4xi32> to vector<2x4xf32>
    %69 = arith.mulf %1, %68 : vector<2x4xf32>
    %cst_27 = arith.constant dense<0.000000e+00> : vector<2xf32>
    %70 = vector.multi_reduction <add>, %69, %cst_27 [1] : vector<2x4xf32> to vector<2xf32>
    %71 = vector.shape_cast %70 : vector<2xf32> to vector<2x1xf32>
    %72 = arith.subf %28, %71 : vector<2x1xf32>
    %73 = vector.shape_cast %72 : vector<2x1xf32> to vector<1x2x1xf32>
    %cst_28 = arith.constant dense<0.000000e+00> : vector<1xf32>
    %74 = vector.multi_reduction <add>, %73, %cst_28 [1, 2] : vector<1x2x1xf32> to vector<1xf32>
    %75 = vector.shape_cast %74 : vector<1xf32> to vector<1x1x1xf32>
    %76 = vector.extract %75[0, 0, 0] : f32 from vector<1x1x1xf32>
    %cst_29 = arith.constant 2.000000e+00 : f32
    %77 = arith.divf %76, %cst_29 : f32
    %78 = vector.extract_strided_slice %0 {offsets = [0, 0, 5], sizes = [2, 8, 1], strides = [1, 1, 1]} : vector<2x8x6xf32> to vector<2x8x1xf32>
    %79 = vector.shape_cast %78 : vector<2x8x1xf32> to vector<2x8xf32>
    %80 = tpu.iota {dimensions = array<i32: 2>} : vector<2x8x6xi32>
    %c5_i32 = arith.constant 5 : i32
    %81 = vector.broadcast %c5_i32 : i32 to vector<2x8x6xi32>
    %82 = arith.cmpi eq, %80, %81 : vector<2x8x6xi32>
    %cst_30 = arith.constant 0xFF800000 : f32
    %83 = vector.broadcast %cst_30 : f32 to vector<2x8x6xf32>
    %84 = arith.select %82, %83, %0 : vector<2x8x6xi1>, vector<2x8x6xf32>
    %cst_31 = arith.constant dense<0xFF800000> : vector<2x8xf32>
    %85 = vector.multi_reduction <maximumf>, %84, %cst_31 [2] : vector<2x8x6xf32> to vector<2x8xf32>
    %86 = arith.cmpf oge, %85, %79 : vector<2x8xf32>
    %87 = arith.extui %86 : vector<2x8xi1> to vector<2x8xi32>
    %88 = arith.sitofp %87 : vector<2x8xi32> to vector<2x8xf32>
    %cst_32 = arith.constant dense<0.000000e+00> : vector<2xf32>
    %89 = vector.multi_reduction <add>, %88, %cst_32 [1] : vector<2x8xf32> to vector<2xf32>
    %90 = vector.shape_cast %89 : vector<2xf32> to vector<2x1xf32>
    %c0_33 = arith.constant 0 : index
    %c0_34 = arith.constant 0 : index
    %91 = vector.load %arg4[%c0_33, %c0_34] : memref<2x1xf32, #tpu.memory_space<vmem>>, vector<2x1xf32>
    %92 = arith.subf %90, %91 : vector<2x1xf32>
    %93 = math.absf %92 : vector<2x1xf32>
    %94 = vector.shape_cast %93 : vector<2x1xf32> to vector<1x2x1xf32>
    %cst_35 = arith.constant dense<0.000000e+00> : vector<1xf32>
    %95 = vector.multi_reduction <add>, %94, %cst_35 [1, 2] : vector<1x2x1xf32> to vector<1xf32>
    %96 = vector.shape_cast %95 : vector<1xf32> to vector<1x1x1xf32>
    %97 = vector.extract %96[0, 0, 0] : f32 from vector<1x1x1xf32>
    %cst_36 = arith.constant 2.000000e+00 : f32
    %98 = arith.divf %97, %cst_36 : f32
    %99 = tpu.iota {dimensions = array<i32: 1>} : vector<1x128xi32>
    %c0_i32 = arith.constant 0 : i32
    %100 = vector.broadcast %c0_i32 : i32 to vector<1x128xi32>
    %101 = arith.cmpi eq, %99, %100 : vector<1x128xi32>
    %cst_37 = arith.constant 0.000000e+00 : f32
    %102 = vector.broadcast %62 : f32 to vector<1x128xf32>
    %103 = vector.broadcast %cst_37 : f32 to vector<1x128xf32>
    %104 = arith.select %101, %102, %103 : vector<1x128xi1>, vector<1x128xf32>
    %c1_i32 = arith.constant 1 : i32
    %105 = vector.broadcast %c1_i32 : i32 to vector<1x128xi32>
    %106 = arith.cmpi eq, %99, %105 : vector<1x128xi32>
    %cst_38 = arith.constant 0.000000e+00 : f32
    %107 = vector.broadcast %77 : f32 to vector<1x128xf32>
    %108 = vector.broadcast %cst_38 : f32 to vector<1x128xf32>
    %109 = arith.select %106, %107, %108 : vector<1x128xi1>, vector<1x128xf32>
    %110 = arith.addf %104, %109 : vector<1x128xf32>
    %c2_i32 = arith.constant 2 : i32
    %111 = vector.broadcast %c2_i32 : i32 to vector<1x128xi32>
    %112 = arith.cmpi eq, %99, %111 : vector<1x128xi32>
    %cst_39 = arith.constant 0.000000e+00 : f32
    %113 = vector.broadcast %98 : f32 to vector<1x128xf32>
    %114 = vector.broadcast %cst_39 : f32 to vector<1x128xf32>
    %115 = arith.select %112, %113, %114 : vector<1x128xi1>, vector<1x128xf32>
    %116 = arith.addf %110, %115 : vector<1x128xf32>
    %c0_40 = arith.constant 0 : index
    %c0_41 = arith.constant 0 : index
    %117 = vector.load %arg5[%c0_40, %c0_41] : memref<1x128xf32, #tpu.memory_space<vmem>>, vector<1x128xf32>
    tpu.vector_store %arg5[%c0_40, %c0_41], %116 {strides = array<i32>} : memref<1x128xf32, #tpu.memory_space<vmem>>, vector<1x128xf32>,
    return
  }
}

</mosaic_0001>

<llo_original>
// kernel: _pre_losses.1
$region0: #{_pre_losses.1}
  #allocation0 [shape = 'u32[]', space=smem, size = 0x4, offset = 0x4, fixed_abs, tag = 'smem constant byte address 0x4 - core index']
  #allocation1 [shape = 'u32[144,128]{1,0:T(1,128)}', space=vmem, size = 0x12000, scoped, tag = 'internal scratch']
  %s0 = inlined_call_operand.vmem [shape: f32[2,8,6], index: 0, kind: input, shape index: {}]
  %s1 = inlined_call_operand.vmem [shape: f32[2,4], index: 1, kind: input, shape index: {}]
  %s2 = inlined_call_operand.vmem [shape: f32[2,6,4], index: 2, kind: input, shape index: {}]
  %s3 = inlined_call_operand.vmem [shape: s32[2,1], index: 3, kind: input, shape index: {}]
  %s4 = inlined_call_operand.vmem [shape: f32[2,1], index: 4, kind: input, shape index: {}]
  %s5 = inlined_call_operand.hbm [shape: f32[1,128], index: 5, kind: output, shape index: {0}]
  %s6 = inlined_call_operand.hbm [shape: f32[2,8], index: 6, kind: output, shape index: {1}]
  %s7 = inlined_call_operand.vmem [shape: bf16[2,8,6], index: 7, kind: output, shape index: {2}]
  %8 = xla_tuple %s5, %s6, %s7
  %s9 = sld [smem:[#allocation0]]
  $region46: #{_pre_losses.1} parent=0
    _
  %s11 = ssub.s32 1, %s9
  %s12 = scalar_select 0, %s11, %s9
  $region1: #{_pre_losses.1} parent=0
    #allocation2 [shape = 'u8[512]{0}', space=vmem, size = 0x400, scoped, tag = 'output window, operand 0, single buffered']
    #allocation3 [shape = 's32[1]{0}', space=sflag, size = 0x4, scoped, tag = 'scoped memory for _pre_losses.1']
    #allocation4 [shape = 'u8[1024]{0}', space=vmem, size = 0x400, scoped, tag = 'output window, operand 1, single buffered']
    #allocation5 [shape = 's32[1]{0}', space=sflag, size = 0x4, scoped, tag = 'scoped memory for _pre_losses.1']
    %13 = vsyncpa [#allocation3], 0
    %14 = vsyncpa [#allocation5], 0
    // Predicated region
    $region2: #{_pre_losses.1} parent=1 // pred_check
      _
    $region3: #{_pre_losses.1} parent=1 // pred_check_branch
      %16 = sbr.rel (0) target = $region5
    $region4: #{_pre_losses.1} parent=1 // pred_region
      _
    $region5: #{_pre_losses.1} parent=1 // pred_fallthru
      _
    // Predicated region
    $region6: #{_pre_losses.1} parent=1 // pred_check
      _
    $region7: #{_pre_losses.1} parent=1 // pred_check_branch
      %18 = sbr.rel (0) target = $region9
    $region8: #{_pre_losses.1} parent=1 // pred_region
      _
    $region9: #{_pre_losses.1} parent=1 // pred_fallthru
      _
    // Predicated region
    $region10: #{_pre_losses.1} parent=1 // pred_check
      _
    $region11: #{_pre_losses.1} parent=1 // pred_check_branch
      %20 = sbr.rel (0) target = $region13
    $region12: #{_pre_losses.1} parent=1 // pred_region
      _
    $region13: #{_pre_losses.1} parent=1 // pred_fallthru
      _
    // Predicated region
    $region14: #{_pre_losses.1} parent=1 // pred_check
      _
    $region15: #{_pre_losses.1} parent=1 // pred_check_branch
      %22 = sbr.rel (0) target = $region17
    $region16: #{_pre_losses.1} parent=1 // pred_region
      _
    $region17: #{_pre_losses.1} parent=1 // pred_fallthru
      _
    // Predicated region
    $region18: #{_pre_losses.1} parent=1 // pred_check
      _
    $region19: #{_pre_losses.1} parent=1 // pred_check_branch
      %24 = sbr.rel (0) target = $region21
    $region20: #{_pre_losses.1} parent=1 // pred_region
      _
    $region21: #{_pre_losses.1} parent=1 // pred_fallthru
      _
    %v25 = vld [vmem:[%s0] sm:$0xff]
    %v26 = vld [vmem:[%s0 + $0x8] sm:$0xff]
    %v27 = vld [vmem:[%s1] sm:$0x3]
    %v28 = vld [vmem:[%s2] sm:$0x3f]
    %v29 = vld [vmem:[%s2 + $0x8] sm:$0x3f]
    %vm30 = vcmask 48128
    %v31 = vsel %vm30, %v25, -inf
    %32 = vmax.xlane.f32.xlu0 %v31
    %v33 = vpop.xlane.xlu0 %32
    %v34 = vsel %vm30, %v26, -inf
    %35 = vmax.xlane.f32.xlu0 %v34
    %v36 = vpop.xlane.xlu0 %35
    %v37 = vsub.f32 %v25, %v33
    %v38 = vsub.f32 %v26, %v36
    %v39 = vmul.f32 %v37, 1.442695
    %v40 = vpow.pop %v39
    %v41 = vmul.f32 %v38, 1.442695
    %v42 = vpow.pop %v41
    %v43 = vsel %vm30, %v40, 0.0
    %44 = vadd.xlane.f32.xlu0 %v43
    %v45 = vpop.xlane.xlu0 %44
    %v46 = vsel %vm30, %v42, 0.0
    %47 = vadd.xlane.f32.xlu0 %v46
    %v48 = vpop.xlane.xlu0 %47
    %v49 = vrcp.pop %v45
    %v50 = vmul.f32 %v40, %v49
    %v51 = vrcp.pop %v48
    %v52 = vmul.f32 %v42, %v51
    %v53 = vlog2.pop %v45
    %v54 = vmul.f32 %v53, 0.6931472
    %v55 = vlog2.pop %v48
    %v56 = vmul.f32 %v55, 0.6931472
    %v57 = vadd.f32 %v54, %v33
    %v58 = vadd.f32 %v56, %v36
    %v61 = vlaneseq
    %v62 = vand.u32 %v61, 127
    %v63 = vlaneseq
    %v64 = vshrl.u32 %v63, 7
    %v65 = vsub.s32 %v62, %v64
    %v66 = vrot.slane %v57, %v65
    %v67 = vlaneseq
    %v68 = vshrl.u32 %v67, 7
    %v69 = vsub.s32 %v62, %v68
    %v70 = vrot.slane %v58, %v69
    %vm71 = vcmask 1041409
    %v72 = vsel %vm71, %v70, %v66
    %vm74 = vcmask 58368
    %75 = vst.msk [vmem:[#allocation4] sm:$0x3] %vm74, %v72
    %v76 = vpack.c.bf16 %v50, %v50
    %v77 = vpack.c.bf16 %v52, %v52
    %vm78 = vcmask 44032
    %79 = vst.msk [vmem:[%s7] sm:$0xf] %vm78, %v76
    %80 = vst.msk [vmem:[%s7 + $0x4] sm:$0xf] %vm78, %v77
    %vm81 = vcmask 25600
    %v82 = vsel %vm81, %v27, -inf
    %83 = vmax.xlane.f32.xlu0 %v82
    %v84 = vpop.xlane.xlu0 %83
    %v85 = vsub.f32 %v27, %v84
    %v86 = vmul.f32 %v85, 1.442695
    %v87 = vpow.pop %v86
    %v88 = vsel %vm81, %v87, 0.0
    %89 = vadd.xlane.f32.xlu0 %v88
    %v90 = vpop.xlane.xlu0 %89
    %v91 = vrcp.pop %v90
    %v92 = vmul.f32 %v87, %v91
    %v93 = vlog2.pop %v90
    %v94 = vmul.f32 %v93, 0.6931472
    %v95 = vadd.f32 %v94, %v84
    %vm96 = vcmask 29696
    %v97 = vsel %vm96, %v28, -inf
    %98 = vmax.xlane.f32.xlu0 %v97
    %v99 = vpop.xlane.xlu0 %98
    %v100 = vsel %vm96, %v29, -inf
    %101 = vmax.xlane.f32.xlu0 %v100
    %v102 = vpop.xlane.xlu0 %101
    %v103 = vsub.f32 %v28, %v99
    %v104 = vsub.f32 %v29, %v102
    %v105 = vmul.f32 %v103, 1.442695
    %v106 = vpow.pop %v105
    %v107 = vmul.f32 %v104, 1.442695
    %v108 = vpow.pop %v107
    %v109 = vsel %vm96, %v106, 0.0
    %110 = vadd.xlane.f32.xlu0 %v109
    %v111 = vpop.xlane.xlu0 %110
    %v112 = vsel %vm96, %v108, 0.0
    %113 = vadd.xlane.f32.xlu0 %v112
    %v114 = vpop.xlane.xlu0 %113
    %v115 = vrcp.pop %v111
    %v116 = vmul.f32 %v106, %v115
    %v117 = vrcp.pop %v114
    %v118 = vmul.f32 %v108, %v117
    %v119 = vsel %vm30, %v50, 0.0
    %v120 = vrot.slane %v119, 4
    %v121 = vadd.f32 %v119, %v120
    %v122 = vrot.slane %v121, 2
    %v123 = vadd.f32 %v121, %v122
    %v124 = vrot.slane %v123, 1
    %v125 = vadd.f32 %v123, %v124
    %v126 = vsel %vm30, %v52, 0.0
    %v127 = vrot.slane %v126, 4
    %v128 = vadd.f32 %v126, %v127
    %v129 = vrot.slane %v128, 2
    %v130 = vadd.f32 %v128, %v129
    %v131 = vrot.slane %v130, 1
    %v132 = vadd.f32 %v130, %v131
    %134 = vbcast.lane.b32.xlu0 %v125, 256
    %v135 = vpop.permute.xlu0 %134
    %137 = vbcast.lane.b32.xlu0 %v132, 256
    %v138 = vpop.permute.xlu0 %137
    %v139 = vmul.f32 %v135, %v116
    %v140 = vmul.f32 %v138, %v118
    %v141 = vsel %vm96, %v139, 0.0
    %v142 = vrot.slane %v141, 4
    %v143 = vadd.f32 %v141, %v142
    %v144 = vrot.slane %v143, 2
    %v145 = vadd.f32 %v143, %v144
    %v146 = vrot.slane %v145, 1
    %v147 = vadd.f32 %v145, %v146
    %v148 = vsel %vm96, %v140, 0.0
    %v149 = vrot.slane %v148, 4
    %v150 = vadd.f32 %v148, %v149
    %v151 = vrot.slane %v150, 2
    %v152 = vadd.f32 %v150, %v151
    %v153 = vrot.slane %v152, 1
    %v154 = vadd.f32 %v152, %v153
    %v157 = vsel %vm71, %v154, %v147
    %v159 = vsel %vm81, %v157, 0.0
    %160 = vadd.xlane.f32.xlu0 %v159
    %v161 = vpop.xlane.xlu0 %160
    %v162 = vadd.f32 %v161, 1e-08
    %v164 = vrot.slane %v162, 1
    %v167 = vrcp.pop %v162
    %v168 = vmul.f32 %v147, %v167
    %v169 = vrcp.pop %v164
    %v170 = vmul.f32 %v154, %v169
    %v171 = vadd.f32 %v92, 1e-08
    %v172 = vadd.f32 %v168, 1e-08
    %v173 = vadd.f32 %v170, 1e-08
    %v175 = vrot.slane %v171, 1
    %v178 = vsub.f32 %v172, %v171
    %v179 = vsub.f32 %v173, %v175
    %v180 = vlog2.pop %v172
    %v181 = vmul.f32 %v180, 0.6931472
    %v182 = vlog2.pop %v173
    %v183 = vmul.f32 %v182, 0.6931472
    %v184 = vlog2.pop %v171
    %v185 = vmul.f32 %v184, 0.6931472
    %v187 = vrot.slane %v185, 1
    %v190 = vsub.f32 %v181, %v185
    %v191 = vsub.f32 %v183, %v187
    %v192 = vmul.f32 %v178, %v190
    %v193 = vmul.f32 %v179, %v191
    %v196 = vrot.slane %v193, 7
    %v197 = vsel %vm71, %v196, %v192
    %v199 = vsel %vm81, %v197, 0.0
    %200 = vadd.xlane.f32.xlu0 %v199
    %v201 = vpop.xlane.xlu0 %200
    %v202 = vrot.slane %v201, 4
    %v203 = vadd.f32 %v201, %v202
    %v204 = vrot.slane %v203, 2
    %v205 = vadd.f32 %v203, %v204
    %v206 = vrot.slane %v205, 1
    %v207 = vadd.f32 %v205, %v206
    %s208 = vtos %v207
    %v209 = vrcp.pop 2.0
    %s210 = vtos %v209
    %s211 = smul.f32 %s208, %s210
    %v212 = vld [vmem:[%s3] sm:$0x3]
    %213 = vset.pattern.permute.xlu0 0
    %214 = vperm.xlu0 %213, %v212
    %v215 = vpop.permute.xlu0 %214
    %vm216 = vcmp.eq.s32.totalorder %v62, %v215
    %v217 = vsel %vm216, 1, 0
    %v218 = vcvt.s32.f32 %v217
    %v219 = vmul.f32 %v27, %v218
    %v220 = vsel %vm81, %v219, 0.0
    %221 = vadd.xlane.f32.xlu0 %v220
    %v222 = vpop.xlane.xlu0 %221
    %v223 = vsub.f32 %v95, %v222
    %vm224 = vcmask 1024
    %v225 = vsel %vm224, %v223, 0.0
    %226 = vadd.xlane.f32.xlu0 %v225
    %v227 = vpop.xlane.xlu0 %226
    %v228 = vrot.slane %v227, 4
    %v229 = vadd.f32 %v227, %v228
    %v230 = vrot.slane %v229, 2
    %v231 = vadd.f32 %v229, %v230
    %v232 = vrot.slane %v231, 1
    %v233 = vadd.f32 %v231, %v232
    %s234 = vtos %v233
    %v235 = vrcp.pop 2.0
    %s236 = vtos %v235
    %s237 = smul.f32 %s234, %s236
    %vm238 = vcmp.eq.s32.totalorder %v62, 5
    %v239 = vsel %vm238, -inf, %v25
    %v240 = vsel %vm238, -inf, %v26
    %v241 = vsel %vm30, %v239, -inf
    %242 = vmax.xlane.f32.xlu0 %v241
    %v243 = vpop.xlane.xlu0 %242
    %v244 = vsel %vm30, %v240, -inf
    %245 = vmax.xlane.f32.xlu0 %v244
    %v246 = vpop.xlane.xlu0 %245
    %vm247 = vcmp.ge.f32.partialorder %v243, %v25
    %vm248 = vcmp.ge.f32.partialorder %v246, %v26
    %v249 = vsel %vm247, 1, 0
    %v250 = vsel %vm248, 1, 0
    %v251 = vcvt.s32.f32 %v249
    %v252 = vcvt.s32.f32 %v250
    %255 = vset.pattern.permute.xlu0 5
    %256 = vperm.xlu0 %255, %v251
    %v257 = vpop.permute.xlu0 %256
    %258 = vset.pattern.permute.xlu0 5
    %259 = vperm.xlu0 %258, %v252
    %v260 = vpop.permute.xlu0 %259
    %v261 = vlaneseq
    %v262 = vshrl.u32 %v261, 7
    %v263 = vsub.s32 %v62, %v262
    %v264 = vrot.slane %v257, %v263
    %v265 = vlaneseq
    %v266 = vshrl.u32 %v265, 7
    %v267 = vsub.s32 %v62, %v266
    %v268 = vrot.slane %v260, %v267
    %v269 = vsel %vm71, %v268, %v264
    %v271 = vsel %vm74, %v269, 0.0
    %272 = vadd.xlane.f32.xlu0 %v271
    %v273 = vpop.xlane.xlu0 %272
    %v274 = vld [vmem:[%s4] sm:$0x3]
    %v275 = vsub.f32 %v273, %v274
    %v276 = vand.u32 2147483647, %v275
    %v277 = vsel %vm224, %v276, 0.0
    %278 = vadd.xlane.f32.xlu0 %v277
    %v279 = vpop.xlane.xlu0 %278
    %v280 = vrot.slane %v279, 4
    %v281 = vadd.f32 %v279, %v280
    %v282 = vrot.slane %v281, 2
    %v283 = vadd.f32 %v281, %v282
    %v284 = vrot.slane %v283, 1
    %v285 = vadd.f32 %v283, %v284
    %s286 = vtos %v285
    %v287 = vrcp.pop 2.0
    %s288 = vtos %v287
    %s289 = smul.f32 %s286, %s288
    %vm290 = vcmp.eq.s32.totalorder %v62, 0
    %v291 = vstv %s211
    %v292 = vsel %vm290, %v291, 0.0
    %vm293 = vcmp.eq.s32.totalorder %v62, 1
    %v294 = vstv %s237
    %v295 = vsel %vm293, %v294, 0.0
    %v296 = vadd.f32 %v292, %v295
    %vm297 = vcmp.eq.s32.totalorder %v62, 2
    %v298 = vstv %s289
    %v299 = vsel %vm297, %v298, 0.0
    %v300 = vadd.f32 %v296, %v299
    %301 = vst [vmem:[#allocation2] sm:$0x1] %v300
    // Predicated region
    $region22: #{_pre_losses.1} parent=1 // pred_check
      _
    $region23: #{_pre_losses.1} parent=1 // pred_check_branch
      %303 = sbr.rel (0) target = $region25
    $region24: #{_pre_losses.1} parent=1 // pred_region
      %s305 = ssub.s32 16, 16
      %306 = vsyncadd [#allocation3], %s305
      %s308 = sshll.u32 [#allocation2], 4
      %s309 = int_to_ptr.vmem [resolvable:$true] %s308
      %311 = dma.vmem_to_hbm [thread:$0]  %s309, 16, %s5, [#allocation3]
    $region25: #{_pre_losses.1} parent=1 // pred_fallthru
      _
    // Predicated region
    $region26: #{_pre_losses.1} parent=1 // pred_check
      _
    $region27: #{_pre_losses.1} parent=1 // pred_check_branch
      %313 = sbr.rel (0) target = $region29
    $region28: #{_pre_losses.1} parent=1 // pred_region
      %s315 = ssub.s32 32, 32
      %316 = vsyncadd [#allocation5], %s315
      %s318 = sshll.u32 [#allocation4], 4
      %s319 = int_to_ptr.vmem [resolvable:$true] %s318
      %321 = dma.vmem_to_hbm [thread:$0]  %s319, 32, %s6, [#allocation5]
    $region29: #{_pre_losses.1} parent=1 // pred_fallthru
      _
    // Predicated region
    $region30: #{_pre_losses.1} parent=1 // pred_check
      _
    $region31: #{_pre_losses.1} parent=1 // pred_check_branch
      %323 = sbr.rel (0) target = $region33
    $region32: #{_pre_losses.1} parent=1 // pred_region
      _
    $region33: #{_pre_losses.1} parent=1 // pred_fallthru
      _
    // Predicated region
    $region34: #{_pre_losses.1} parent=1 // pred_check
      _
    $region35: #{_pre_losses.1} parent=1 // pred_check_branch
      %325 = sbr.rel (0) target = $region37
    $region36: #{_pre_losses.1} parent=1 // pred_region
      %326 = dma.done [#allocation3], 16
    $region37: #{_pre_losses.1} parent=1 // pred_fallthru
      _
    // Predicated region
    $region38: #{_pre_losses.1} parent=1 // pred_check
      _
    $region39: #{_pre_losses.1} parent=1 // pred_check_branch
      %328 = sbr.rel (0) target = $region41
    $region40: #{_pre_losses.1} parent=1 // pred_region
      %329 = dma.done [#allocation5], 32
    $region41: #{_pre_losses.1} parent=1 // pred_fallthru
      _
    // Predicated region
    $region42: #{_pre_losses.1} parent=1 // pred_check
      _
    $region43: #{_pre_losses.1} parent=1 // pred_check_branch
      %331 = sbr.rel (0) target = $region45
    $region44: #{_pre_losses.1} parent=1 // pred_region
      _
    $region45: #{_pre_losses.1} parent=1 // pred_fallthru
      _
    %332 = vsyncpa [#allocation3], 1
    %333 = vsyncpa [#allocation5], 1

</llo_original>
